<compile_context>
chip_gen: v7x
topology: tpu7x:2x2x1
jax: 0.10.0
libtpu: 0.0.40
codegen_flags: <defaults>
</compile_context>

<pallas_src>
import math

import numpy as np
import jax
import jax.numpy as jnp
from jax.experimental import pallas as pl
from jax.experimental.pallas import tpu as pltpu


# ----------------------------------------------------------------------------
# Config (mirrors the PyTorch config dict the module's __init__ expects)
# ----------------------------------------------------------------------------
CONFIG = {
    "model": {
        "z_dim": 8,
        "init_mode": "normal_init",
        "discriminator": {
            "hidden_dim": 32,
            "out_dim": 2,
            "num_layers": 4,
            "bn": [False, True, False, False],
        },
    }
}

LANES = 128      # lane width of the packed slab / in-kernel activations
VEC_ROWS = 8     # 8-aligned row slot reserved for each bias / gamma / beta row


def _round_up(x, m):
    return (x + m - 1) // m * m


# ----------------------------------------------------------------------------
# Parameter init (matches weight_init: normal(0, 0.02) or kaiming, bias = 0,
# BN gamma = 1, beta = 0). Weights kept PyTorch-style (out_d, in_d) here.
# ----------------------------------------------------------------------------
def init_discriminator_params(key, config):
    m = config["model"]
    z_dim = m["z_dim"]
    d = m["discriminator"]
    hidden_dim, out_dim = d["hidden_dim"], d["out_dim"]
    num_layers, bn = d["num_layers"], d["bn"]
    init_mode = m["init_mode"]

    layers = []
    for i in range(num_layers):
        in_d = z_dim if i == 0 else hidden_dim
        out_d = out_dim if i == num_layers - 1 else hidden_dim
        key, k = jax.random.split(key)
        if init_mode == "kaiming_init":
            std = math.sqrt(2.0 / in_d)   # kaiming_normal_, fan_in, a=0
            w = jax.random.normal(k, (out_d, in_d), dtype=jnp.float32) * std
        else:
            w = jax.random.normal(k, (out_d, in_d), dtype=jnp.float32) * 0.02
        layer = {"w": w, "b": jnp.zeros((out_d,), jnp.float32)}
        if bn[i]:
            layer["gamma"] = jnp.ones((out_d,), jnp.float32)
            layer["beta"] = jnp.zeros((out_d,), jnp.float32)
        layers.append(layer)
    return layers


# ----------------------------------------------------------------------------
# Pack everything into one (R, 128) f32 slab — ONCE (at init / after each
# optimizer step), not per forward call. Weights pre-transposed to
# (in_d, out_d) in 8-row-aligned slots sized to the REAL in_d, zero padded.
# Built host-side with numpy -> single concatenate -> single H2D transfer.
# ----------------------------------------------------------------------------
def pack_params(layers, bn):
    blocks = []
    offsets = []
    row = 0
    for i, layer in enumerate(layers):
        out_d, in_d = layer["w"].shape
        w_rows = _round_up(in_d, VEC_ROWS)          # 8, 32, 32, 32 — not 128
        off = {"w": row, "w_rows": w_rows, "in_d": in_d, "out_d": out_d}

        wb = np.zeros((w_rows, LANES), np.float32)
        wb[:in_d, :out_d] = np.asarray(layer["w"]).T          # (in_d, out_d)
        blocks.append(wb)
        row += w_rows

        off["b"] = row
        bb = np.zeros((VEC_ROWS, LANES), np.float32)
        bb[0, :out_d] = np.asarray(layer["b"])
        blocks.append(bb)
        row += VEC_ROWS

        if bn[i]:
            off["gamma"] = row
            gb = np.zeros((VEC_ROWS, LANES), np.float32)
            gb[0, :out_d] = np.asarray(layer["gamma"])
            blocks.append(gb)
            row += VEC_ROWS

            off["beta"] = row
            tb = np.zeros((VEC_ROWS, LANES), np.float32)
            tb[0, :out_d] = np.asarray(layer["beta"])
            blocks.append(tb)
            row += VEC_ROWS

        offsets.append(off)

    slab = jnp.asarray(np.concatenate(blocks, axis=0))   # (152, 128) f32, one H2D
    return slab, tuple(offsets)


# ----------------------------------------------------------------------------
# Kernel
# ----------------------------------------------------------------------------
def make_discriminator_kernel(num_layers, bn, offsets):
    def kernel(z_ref, p_ref, out_ref):
        # Lane-dense activations: padded lanes stay exactly 0 throughout
        # because padded weight rows/cols, biases and BN params are all 0.
        x = z_ref[...]                                      # (B, k0) f32
        for i in range(num_layers):
            off = offsets[i]
            w_rows = off["w_rows"]
            w = p_ref[off["w"]:off["w"] + w_rows, :]        # (w_rows, 128), pre-transposed
            b = p_ref[off["b"]:off["b"] + 1, :]             # (1, 128)
            # Static K slice: never stream padded zero-lanes through the MXU.
            xk = x if x.shape[1] == w_rows else x[:, :w_rows]
            x = jnp.dot(xk, w, preferred_element_type=jnp.float32) + b
            if bn[i]:
                g = p_ref[off["gamma"]:off["gamma"] + 1, :]
                beta = p_ref[off["beta"]:off["beta"] + 1, :]
                # BatchNorm1d, training mode: batch mean / biased variance, eps=1e-5.
                mu = jnp.mean(x, axis=0, keepdims=True)
                var = jnp.mean((x - mu) ** 2, axis=0, keepdims=True)
                x = (x - mu) * jax.lax.rsqrt(var + 1e-5) * g + beta
            if i != num_layers - 1:
                x = jnp.where(x >= 0.0, x, 0.2 * x)         # LeakyReLU(0.2)
        out_ref[...] = x                                    # (B, 128), lane-dense store
    return kernel


# ----------------------------------------------------------------------------
# Forward builder: returns a jitted (z, slab) -> (B, out_dim) function.
# ----------------------------------------------------------------------------
def make_discriminator_forward(config, offsets):
    d = config["model"]["discriminator"]
    num_layers, bn, out_dim = d["num_layers"], d["bn"], d["out_dim"]
    z_dim = config["model"]["z_dim"]
    k0 = offsets[0]["w_rows"]

    kernel = make_discriminator_kernel(num_layers, bn, offsets)
    vmem = pl.BlockSpec(memory_space=pltpu.MemorySpace.VMEM)

    slab_rows = offsets[-1]["b"] + VEC_ROWS
    flops_per_row = 2 * sum(o["in_d"] * o["out_d"] for o in offsets)
    trans_per_call = LANES * sum(1 for i in range(num_layers) if bn[i])

    @jax.jit
    def forward(z, slab):
        B = z.shape[0]
        zin = z.astype(jnp.float32)
        if z_dim != k0:   # only if z_dim isn't already 8-aligned (not here)
            zin = jnp.pad(zin, ((0, 0), (0, k0 - z_dim)))

        cost = pl.CostEstimate(
            flops=flops_per_row * B,
            transcendentals=trans_per_call,
            bytes_accessed=slab_rows * LANES * 4 + B * k0 * 4 + B * LANES * 4,
        )
        out_pad = pl.pallas_call(
            kernel,
            out_shape=jax.ShapeDtypeStruct((B, LANES), jnp.float32),
            in_specs=[vmem, vmem],
            out_specs=vmem,
            cost_estimate=cost,
        )(zin, slab)

        # PyTorch: self.net(z).squeeze()
        return jnp.squeeze(out_pad[:, :out_dim])

    return forward


# ----------------------------------------------------------------------------
# Pure-JAX reference (PyTorch semantics) for a correctness check
# ----------------------------------------------------------------------------
def reference_forward(z, layers, bn):
    x = z.astype(jnp.float32)
    n = len(layers)
    for i, layer in enumerate(layers):
        x = x @ layer["w"].T + layer["b"][None, :]
        if bn[i]:
            mu = jnp.mean(x, axis=0, keepdims=True)
            var = jnp.mean((x - mu) ** 2, axis=0, keepdims=True)
            x = (x - mu) / jnp.sqrt(var + 1e-5) * layer["gamma"][None, :] + layer["beta"][None, :]
        if i != n - 1:
            x = jnp.where(x >= 0.0, x, 0.2 * x)
    return jnp.squeeze(x)


# ----------------------------------------------------------------------------
if __name__ == "__main__":
    key = jax.random.PRNGKey(0)
    key_params, key_z = jax.random.split(key)

    layers = init_discriminator_params(key_params, CONFIG)
    bn = CONFIG["model"]["discriminator"]["bn"]

    # Pack ONCE at init; re-pack only after parameter updates.
    slab, offsets = pack_params(layers, bn)
    forward = make_discriminator_forward(CONFIG, offsets)

    B = 8
    z_dim = CONFIG["model"]["z_dim"]
    z = jax.random.normal(key_z, (B, z_dim), dtype=jnp.float32)

    out = forward(z, slab)
    jax.block_until_ready(out)

    ref = reference_forward(z, layers, bn)

    expected_shape = (B, CONFIG["model"]["discriminator"]["out_dim"])
    assert out.shape == expected_shape, (out.shape, expected_shape)
    assert bool(jnp.all(jnp.isfinite(out)))
    assert bool(jnp.allclose(out, ref, atol=1e-4, rtol=1e-4)), float(
        jnp.max(jnp.abs(out - ref)))
    print("KERNEL_OK")
</pallas_src>

<mosaic_0001>
module attributes {stable_mosaic.version = 11 : i64} {
  func.func @kernel(%arg0: memref<8x8xf32, #tpu.memory_space<vmem>>, %arg1: memref<152x128xf32, #tpu.memory_space<vmem>>, %arg2: memref<8x128xf32, #tpu.memory_space<vmem>>) attributes {dimension_semantics = [], scalar_prefetch = 0 : i64, scratch_operands = 0 : i64, tpu.core_type = #tpu.core_type<tc>} {
    %c0 = arith.constant 0 : index
    %c0_0 = arith.constant 0 : index
    %0 = vector.load %arg0[%c0, %c0_0] : memref<8x8xf32, #tpu.memory_space<vmem>>, vector<8x8xf32>
    %c0_1 = arith.constant 0 : index
    %c0_2 = arith.constant 0 : index
    %1 = vector.load %arg1[%c0_1, %c0_2] : memref<152x128xf32, #tpu.memory_space<vmem>>, vector<8x128xf32>
    %c8 = arith.constant 8 : index
    %c0_3 = arith.constant 0 : index
    %2 = vector.load %arg1[%c8, %c0_3] : memref<152x128xf32, #tpu.memory_space<vmem>>, vector<1x128xf32>
    %cst = arith.constant dense<0.000000e+00> : vector<8x128xf32>
    %3 = tpu.matmul %0, %1, %cst {dimension_numbers = #tpu.dot_dimension_numbers<[1], [0], [0], [1], [0, 0, 1, 1], [], []>} : vector<8x8xf32>, vector<8x128xf32>, vector<8x128xf32> -> vector<8x128xf32>
    %4 = vector.broadcast %2 : vector<1x128xf32> to vector<8x128xf32>
    %5 = arith.addf %3, %4 : vector<8x128xf32>
    %cst_4 = arith.constant 0.000000e+00 : f32
    %6 = vector.broadcast %cst_4 : f32 to vector<8x128xf32>
    %7 = arith.cmpf oge, %5, %6 : vector<8x128xf32>
    %cst_5 = arith.constant 2.000000e-01 : f32
    %8 = vector.broadcast %cst_5 : f32 to vector<8x128xf32>
    %9 = arith.mulf %8, %5 : vector<8x128xf32>
    %10 = arith.select %7, %5, %9 : vector<8x128xi1>, vector<8x128xf32>
    %c16 = arith.constant 16 : index
    %c0_6 = arith.constant 0 : index
    %11 = vector.load %arg1[%c16, %c0_6] : memref<152x128xf32, #tpu.memory_space<vmem>>, vector<32x128xf32>
    %c48 = arith.constant 48 : index
    %c0_7 = arith.constant 0 : index
    %12 = vector.load %arg1[%c48, %c0_7] : memref<152x128xf32, #tpu.memory_space<vmem>>, vector<1x128xf32>
    %13 = vector.extract_strided_slice %10 {offsets = [0, 0], sizes = [8, 32], strides = [1, 1]} : vector<8x128xf32> to vector<8x32xf32>
    %cst_8 = arith.constant dense<0.000000e+00> : vector<8x128xf32>
    %14 = tpu.matmul %13, %11, %cst_8 {dimension_numbers = #tpu.dot_dimension_numbers<[1], [0], [0], [1], [0, 0, 1, 1], [], []>} : vector<8x32xf32>, vector<32x128xf32>, vector<8x128xf32> -> vector<8x128xf32>
    %15 = vector.broadcast %12 : vector<1x128xf32> to vector<8x128xf32>
    %16 = arith.addf %14, %15 : vector<8x128xf32>
    %c56 = arith.constant 56 : index
    %c0_9 = arith.constant 0 : index
    %17 = vector.load %arg1[%c56, %c0_9] : memref<152x128xf32, #tpu.memory_space<vmem>>, vector<1x128xf32>
    %c64 = arith.constant 64 : index
    %c0_10 = arith.constant 0 : index
    %18 = vector.load %arg1[%c64, %c0_10] : memref<152x128xf32, #tpu.memory_space<vmem>>, vector<1x128xf32>
    %cst_11 = arith.constant dense<0.000000e+00> : vector<128xf32>
    %19 = vector.multi_reduction <add>, %16, %cst_11 [0] : vector<8x128xf32> to vector<128xf32>
    %20 = vector.shape_cast %19 : vector<128xf32> to vector<1x128xf32>
    %cst_12 = arith.constant 8.000000e+00 : f32
    %21 = vector.broadcast %cst_12 : f32 to vector<1x128xf32>
    %22 = arith.divf %20, %21 : vector<1x128xf32>
    %23 = vector.broadcast %22 : vector<1x128xf32> to vector<8x128xf32>
    %24 = arith.subf %16, %23 : vector<8x128xf32>
    %25 = arith.mulf %24, %24 : vector<8x128xf32>
    %cst_13 = arith.constant dense<0.000000e+00> : vector<128xf32>
    %26 = vector.multi_reduction <add>, %25, %cst_13 [0] : vector<8x128xf32> to vector<128xf32>
    %27 = vector.shape_cast %26 : vector<128xf32> to vector<1x128xf32>
    %cst_14 = arith.constant 8.000000e+00 : f32
    %28 = vector.broadcast %cst_14 : f32 to vector<1x128xf32>
    %29 = arith.divf %27, %28 : vector<1x128xf32>
    %30 = vector.broadcast %22 : vector<1x128xf32> to vector<8x128xf32>
    %31 = arith.subf %16, %30 : vector<8x128xf32>
    %cst_15 = arith.constant 9.99999974E-6 : f32
    %32 = vector.broadcast %cst_15 : f32 to vector<1x128xf32>
    %33 = arith.addf %29, %32 : vector<1x128xf32>
    %34 = math.rsqrt %33 : vector<1x128xf32>
    %35 = vector.broadcast %34 : vector<1x128xf32> to vector<8x128xf32>
    %36 = arith.mulf %31, %35 : vector<8x128xf32>
    %37 = vector.broadcast %17 : vector<1x128xf32> to vector<8x128xf32>
    %38 = arith.mulf %36, %37 : vector<8x128xf32>
    %39 = vector.broadcast %18 : vector<1x128xf32> to vector<8x128xf32>
    %40 = arith.addf %38, %39 : vector<8x128xf32>
    %cst_16 = arith.constant 0.000000e+00 : f32
    %41 = vector.broadcast %cst_16 : f32 to vector<8x128xf32>
    %42 = arith.cmpf oge, %40, %41 : vector<8x128xf32>
    %cst_17 = arith.constant 2.000000e-01 : f32
    %43 = vector.broadcast %cst_17 : f32 to vector<8x128xf32>
    %44 = arith.mulf %43, %40 : vector<8x128xf32>
    %45 = arith.select %42, %40, %44 : vector<8x128xi1>, vector<8x128xf32>
    %c72 = arith.constant 72 : index
    %c0_18 = arith.constant 0 : index
    %46 = vector.load %arg1[%c72, %c0_18] : memref<152x128xf32, #tpu.memory_space<vmem>>, vector<32x128xf32>
    %c104 = arith.constant 104 : index
    %c0_19 = arith.constant 0 : index
    %47 = vector.load %arg1[%c104, %c0_19] : memref<152x128xf32, #tpu.memory_space<vmem>>, vector<1x128xf32>
    %48 = vector.extract_strided_slice %45 {offsets = [0, 0], sizes = [8, 32], strides = [1, 1]} : vector<8x128xf32> to vector<8x32xf32>
    %cst_20 = arith.constant dense<0.000000e+00> : vector<8x128xf32>
    %49 = tpu.matmul %48, %46, %cst_20 {dimension_numbers = #tpu.dot_dimension_numbers<[1], [0], [0], [1], [0, 0, 1, 1], [], []>} : vector<8x32xf32>, vector<32x128xf32>, vector<8x128xf32> -> vector<8x128xf32>
    %50 = vector.broadcast %47 : vector<1x128xf32> to vector<8x128xf32>
    %51 = arith.addf %49, %50 : vector<8x128xf32>
    %cst_21 = arith.constant 0.000000e+00 : f32
    %52 = vector.broadcast %cst_21 : f32 to vector<8x128xf32>
    %53 = arith.cmpf oge, %51, %52 : vector<8x128xf32>
    %cst_22 = arith.constant 2.000000e-01 : f32
    %54 = vector.broadcast %cst_22 : f32 to vector<8x128xf32>
    %55 = arith.mulf %54, %51 : vector<8x128xf32>
    %56 = arith.select %53, %51, %55 : vector<8x128xi1>, vector<8x128xf32>
    %c112 = arith.constant 112 : index
    %c0_23 = arith.constant 0 : index
    %57 = vector.load %arg1[%c112, %c0_23] : memref<152x128xf32, #tpu.memory_space<vmem>>, vector<32x128xf32>
    %c144 = arith.constant 144 : index
    %c0_24 = arith.constant 0 : index
    %58 = vector.load %arg1[%c144, %c0_24] : memref<152x128xf32, #tpu.memory_space<vmem>>, vector<1x128xf32>
    %59 = vector.extract_strided_slice %56 {offsets = [0, 0], sizes = [8, 32], strides = [1, 1]} : vector<8x128xf32> to vector<8x32xf32>
    %cst_25 = arith.constant dense<0.000000e+00> : vector<8x128xf32>
    %60 = tpu.matmul %59, %57, %cst_25 {dimension_numbers = #tpu.dot_dimension_numbers<[1], [0], [0], [1], [0, 0, 1, 1], [], []>} : vector<8x32xf32>, vector<32x128xf32>, vector<8x128xf32> -> vector<8x128xf32>
    %61 = vector.broadcast %58 : vector<1x128xf32> to vector<8x128xf32>
    %62 = arith.addf %60, %61 : vector<8x128xf32>
    %c0_26 = arith.constant 0 : index
    %c0_27 = arith.constant 0 : index
    %63 = vector.load %arg2[%c0_26, %c0_27] : memref<8x128xf32, #tpu.memory_space<vmem>>, vector<8x128xf32>
    tpu.vector_store %arg2[%c0_26, %c0_27], %62 {strides = array<i32>} : memref<8x128xf32, #tpu.memory_space<vmem>>, vector<8x128xf32>,
    return
  }
}

</mosaic_0001>

<llo_original>
// kernel: forward.1
$region0: #{forward.1}
  #allocation0 [shape = 'u32[]', space=smem, size = 0x4, offset = 0x4, fixed_abs, tag = 'smem constant byte address 0x4 - core index']
  #allocation1 [shape = 'u32[144,128]{1,0:T(1,128)}', space=vmem, size = 0x12000, scoped, tag = 'internal scratch']
  %s0 = inlined_call_operand.hbm [shape: f32[8,8], index: 0, kind: input, shape index: {}]
  %s1 = inlined_call_operand.hbm [shape: f32[152,128], index: 1, kind: input, shape index: {}]
  %s2 = inlined_call_operand.vmem [shape: f32[8,128], index: 2, kind: output, shape index: {}]
  %s3 = sld [smem:[#allocation0]]
  $region26: #{forward.1} parent=0
    _
  %s5 = ssub.s32 1, %s3
  %s6 = scalar_select 0, %s5, %s3
  $region1: #{forward.1} parent=0
    #allocation2 [shape = 'u8[4096]{0}', space=vmem, size = 0x1000, scoped, tag = 'input window, operand 0, single buffered']
    #allocation3 [shape = 's32[1]{0}', space=sflag, size = 0x4, scoped, tag = 'scoped memory for forward.1']
    #allocation4 [shape = 'u8[77824]{0}', space=vmem, size = 0x13000, scoped, tag = 'input window, operand 1, single buffered']
    #allocation5 [shape = 's32[1]{0}', space=sflag, size = 0x4, scoped, tag = 'scoped memory for forward.1']
    %7 = vsyncpa [#allocation3], 0
    %8 = vsyncpa [#allocation5], 0
    // Predicated region
    $region2: #{forward.1} parent=1 // pred_check
      _
    $region3: #{forward.1} parent=1 // pred_check_branch
      %10 = sbr.rel (0) target = $region5
    $region4: #{forward.1} parent=1 // pred_region
      %s12 = ssub.s32 128, 128
      %13 = vsyncadd [#allocation3], %s12
      %s15 = sshll.u32 [#allocation2], 4
      %s16 = int_to_ptr.vmem [resolvable:$true] %s15
      %18 = dma.hbm_to_vmem [thread:$0]  %s0, 128, %s16, [#allocation3]
    $region5: #{forward.1} parent=1 // pred_fallthru
      _
    // Predicated region
    $region6: #{forward.1} parent=1 // pred_check
      _
    $region7: #{forward.1} parent=1 // pred_check_branch
      %20 = sbr.rel (0) target = $region9
    $region8: #{forward.1} parent=1 // pred_region
      %s22 = ssub.s32 2432, 2432
      %23 = vsyncadd [#allocation5], %s22
      %s24 = sshll.u32 [#allocation4], 4
      %s25 = int_to_ptr.vmem [resolvable:$true] %s24
      %30 = dma.hbm_to_vmem [thread:$0]  %s1, 2432, %s25, [#allocation5], 128, 128, 8
    $region9: #{forward.1} parent=1 // pred_fallthru
      _
    // Predicated region
    $region10: #{forward.1} parent=1 // pred_check
      _
    $region11: #{forward.1} parent=1 // pred_check_branch
      %32 = sbr.rel (0) target = $region13
    $region12: #{forward.1} parent=1 // pred_region
      %33 = dma.done [#allocation3], 128
    $region13: #{forward.1} parent=1 // pred_fallthru
      _
    // Predicated region
    $region14: #{forward.1} parent=1 // pred_check
      _
    $region15: #{forward.1} parent=1 // pred_check_branch
      %35 = sbr.rel (0) target = $region17
    $region16: #{forward.1} parent=1 // pred_region
      %36 = dma.done [#allocation5], 2432
    $region17: #{forward.1} parent=1 // pred_fallthru
      _
    %v37 = vld [vmem:[#allocation2] sm:$0xff]
    %v38 = vld [vmem:[#allocation4] sm:$0xff]
    %v39 = vld [vmem:[#allocation4 + $0x8] sm:$0x1]
    %v40 = vlaneseq
    %v41 = vshrl.u32 %v40, 7
    %v42 = vsub.s32 0, %v41
    %v43 = vrot.slane %v39, %v42
    %vm44 = vcmask 64512
    %v46 = vsel %vm44, %v37, 0
    %48 = vmatprep.subr.mxu0 0.0
    %49 = vmatpush1.msra.mxu0 %v38
    %50 = vmatprep.subr.mxu0 0.0
    %51 = vmatpush1.msra.mxu0 0.0
    %52 = vmatprep.subr.mxu0 0.0
    %53 = vmatpush1.msra.mxu0 0.0
    %54 = vmatprep.subr.mxu0 0.0
    %55 = vmatpush1.msra.mxu0 0.0
    %56 = vmatprep.subr.mxu0 0.0
    %57 = vmatpush1.msra.mxu0 0.0
    %58 = vmatprep.subr.mxu0 0.0
    %59 = vmatpush1.msra.mxu0 0.0
    %60 = vmatprep.subr.mxu0 0.0
    %61 = vmatpush1.msra.mxu0 0.0
    %62 = vmatprep.subr.mxu0 0.0
    %63 = vmatpush1.msra.mxu0 0.0
    %64 = vmatprep.subr.mxu0 0.0
    %65 = vmatpush1.msra.mxu0 0.0
    %66 = vmatprep.subr.mxu0 0.0
    %67 = vmatpush1.msra.mxu0 0.0
    %68 = vmatprep.subr.mxu0 0.0
    %69 = vmatpush1.msra.mxu0 0.0
    %70 = vmatprep.subr.mxu0 0.0
    %71 = vmatpush1.msra.mxu0 0.0
    %72 = vmatprep.subr.mxu0 0.0
    %73 = vmatpush1.msra.mxu0 0.0
    %74 = vmatprep.subr.mxu0 0.0
    %75 = vmatpush1.msra.mxu0 0.0
    %76 = vmatprep.subr.mxu0 0.0
    %77 = vmatpush1.msra.mxu0 0.0
    %78 = vmatprep.subr.mxu0 0.0
    %79 = vmatpush1.msra.mxu0 0.0
    %80 = vmatprep.subr.mxu0 0.0
    %81 = vmatpush1.msra.mxu0 0.0
    %82 = vmatprep.subr.mxu0 0.0
    %83 = vmatpush1.msra.mxu0 0.0
    %84 = vmatprep.subr.mxu0 0.0
    %85 = vmatpush1.msra.mxu0 0.0
    %86 = vmatprep.subr.mxu0 0.0
    %87 = vmatpush1.msra.mxu0 0.0
    %88 = vmatprep.subr.mxu0 0.0
    %89 = vmatpush1.msra.mxu0 0.0
    %90 = vmatprep.subr.mxu0 0.0
    %91 = vmatpush1.msra.mxu0 0.0
    %92 = vmatprep.subr.mxu0 0.0
    %93 = vmatpush1.msra.mxu0 0.0
    %94 = vmatprep.subr.mxu0 0.0
    %95 = vmatpush1.msra.mxu0 0.0
    %96 = vmatprep.subr.mxu0 0.0
    %97 = vmatpush1.msra.mxu0 0.0
    %98 = vmatprep.subr.mxu0 0.0
    %99 = vmatpush1.msra.mxu0 0.0
    %100 = vmatprep.subr.mxu0 0.0
    %101 = vmatpush1.msra.mxu0 0.0
    %102 = vmatprep.subr.mxu0 0.0
    %103 = vmatpush1.msra.mxu0 0.0
    %104 = vmatprep.subr.mxu0 0.0
    %105 = vmatpush1.msra.mxu0 0.0
    %106 = vmatprep.subr.mxu0 0.0
    %107 = vmatpush1.msra.mxu0 0.0
    %108 = vmatprep.subr.mxu0 0.0
    %109 = vmatpush1.msra.mxu0 0.0
    %110 = vmatprep.subr.mxu0 0.0
    %111 = vmatpush1.msra.mxu0 0.0
    %112 = vmatprep.mubr.f32.mxu0 0.0
    %113 = vmatmul.mubr.f32.gmra.mrb[0].mxu0 %v46
    %v114 = vpop.f32.mrb[0].mxu0
    %v115 = vadd.f32 %v43, %v114
    %v116 = vpop.f32.mrb[0].mxu0
    %117 = vdwg.mxu0
    %vm118 = vcmp.ge.f32.partialorder %v115, 0.0
    %v119 = vmul.f32 %v115, 0.2
    %v120 = vsel %vm118, %v115, %v119
    %v121 = vld [vmem:[#allocation4 + $0x10] sm:$0xff]
    %v122 = vld [vmem:[#allocation4 + $0x18] sm:$0xff]
    %v123 = vld [vmem:[#allocation4 + $0x20] sm:$0xff]
    %v124 = vld [vmem:[#allocation4 + $0x28] sm:$0xff]
    %v125 = vld [vmem:[#allocation4 + $0x30] sm:$0x1]
    %v126 = vlaneseq
    %v127 = vshrl.u32 %v126, 7
    %v128 = vsub.s32 0, %v127
    %v129 = vrot.slane %v125, %v128
    %vm130 = vcmask 261120
    %v132 = vsel %vm130, %v120, 0
    %134 = vmatprep.subr.mxu0 0.0
    %135 = vmatpush1.msra.mxu0 %v121
    %136 = vmatprep.subr.mxu0 0.0
    %137 = vmatpush1.msra.mxu0 %v122
    %138 = vmatprep.subr.mxu0 0.0
    %139 = vmatpush1.msra.mxu0 %v123
    %140 = vmatprep.subr.mxu0 0.0
    %141 = vmatpush1.msra.mxu0 %v124
    %142 = vmatprep.subr.mxu0 0.0
    %143 = vmatpush1.msra.mxu0 0.0
    %144 = vmatprep.subr.mxu0 0.0
    %145 = vmatpush1.msra.mxu0 0.0
    %146 = vmatprep.subr.mxu0 0.0
    %147 = vmatpush1.msra.mxu0 0.0
    %148 = vmatprep.subr.mxu0 0.0
    %149 = vmatpush1.msra.mxu0 0.0
    %150 = vmatprep.subr.mxu0 0.0
    %151 = vmatpush1.msra.mxu0 0.0
    %152 = vmatprep.subr.mxu0 0.0
    %153 = vmatpush1.msra.mxu0 0.0
    %154 = vmatprep.subr.mxu0 0.0
    %155 = vmatpush1.msra.mxu0 0.0
    %156 = vmatprep.subr.mxu0 0.0
    %157 = vmatpush1.msra.mxu0 0.0
    %158 = vmatprep.subr.mxu0 0.0
    %159 = vmatpush1.msra.mxu0 0.0
    %160 = vmatprep.subr.mxu0 0.0
    %161 = vmatpush1.msra.mxu0 0.0
    %162 = vmatprep.subr.mxu0 0.0
    %163 = vmatpush1.msra.mxu0 0.0
    %164 = vmatprep.subr.mxu0 0.0
    %165 = vmatpush1.msra.mxu0 0.0
    %166 = vmatprep.subr.mxu0 0.0
    %167 = vmatpush1.msra.mxu0 0.0
    %168 = vmatprep.subr.mxu0 0.0
    %169 = vmatpush1.msra.mxu0 0.0
    %170 = vmatprep.subr.mxu0 0.0
    %171 = vmatpush1.msra.mxu0 0.0
    %172 = vmatprep.subr.mxu0 0.0
    %173 = vmatpush1.msra.mxu0 0.0
    %174 = vmatprep.subr.mxu0 0.0
    %175 = vmatpush1.msra.mxu0 0.0
    %176 = vmatprep.subr.mxu0 0.0
    %177 = vmatpush1.msra.mxu0 0.0
    %178 = vmatprep.subr.mxu0 0.0
    %179 = vmatpush1.msra.mxu0 0.0
    %180 = vmatprep.subr.mxu0 0.0
    %181 = vmatpush1.msra.mxu0 0.0
    %182 = vmatprep.subr.mxu0 0.0
    %183 = vmatpush1.msra.mxu0 0.0
    %184 = vmatprep.subr.mxu0 0.0
    %185 = vmatpush1.msra.mxu0 0.0
    %186 = vmatprep.subr.mxu0 0.0
    %187 = vmatpush1.msra.mxu0 0.0
    %188 = vmatprep.subr.mxu0 0.0
    %189 = vmatpush1.msra.mxu0 0.0
    %190 = vmatprep.subr.mxu0 0.0
    %191 = vmatpush1.msra.mxu0 0.0
    %192 = vmatprep.subr.mxu0 0.0
    %193 = vmatpush1.msra.mxu0 0.0
    %194 = vmatprep.subr.mxu0 0.0
    %195 = vmatpush1.msra.mxu0 0.0
    %196 = vmatprep.subr.mxu0 0.0
    %197 = vmatpush1.msra.mxu0 0.0
    %198 = vmatprep.mubr.f32.mxu0 0.0
    %199 = vmatmul.mubr.f32.gmra.mrb[0].mxu0 %v132
    %v200 = vpop.f32.mrb[0].mxu0
    %v201 = vadd.f32 %v129, %v200
    %v202 = vpop.f32.mrb[0].mxu0
    %203 = vdwg.mxu0
    %v204 = vld [vmem:[#allocation4 + $0x38] sm:$0x1]
    %v205 = vld [vmem:[#allocation4 + $0x40] sm:$0x1]
    %v206 = vrot.slane %v201, 4
    %v207 = vadd.f32 %v201, %v206
    %v208 = vrot.slane %v207, 2
    %v209 = vadd.f32 %v207, %v208
    %v210 = vrot.slane %v209, 1
    %v211 = vadd.f32 %v209, %v210
    %v212 = vrcp.pop 8.0
    %v213 = vmul.f32 %v211, %v212
    %v214 = vsub.f32 %v201, %v213
    %v215 = vmul.f32 %v214, %v214
    %v216 = vrot.slane %v215, 4
    %v217 = vadd.f32 %v215, %v216
    %v218 = vrot.slane %v217, 2
    %v219 = vadd.f32 %v217, %v218
    %v220 = vrot.slane %v219, 1
    %v221 = vadd.f32 %v219, %v220
    %v222 = vmul.f32 %v221, %v212
    %v223 = vadd.f32 %v222, 1e-05
    %v224 = vrsqrt.pop %v223
    %v225 = vmul.f32 %v214, %v224
    %v226 = vlaneseq
    %v227 = vshrl.u32 %v226, 7
    %v228 = vsub.s32 0, %v227
    %v229 = vrot.slane %v204, %v228
    %v230 = vmul.f32 %v225, %v229
    %v231 = vlaneseq
    %v232 = vshrl.u32 %v231, 7
    %v233 = vsub.s32 0, %v232
    %v234 = vrot.slane %v205, %v233
    %v235 = vadd.f32 %v230, %v234
    %vm236 = vcmp.ge.f32.partialorder %v235, 0.0
    %v237 = vmul.f32 %v235, 0.2
    %v238 = vsel %vm236, %v235, %v237
    %v239 = vld [vmem:[#allocation4 + $0x48] sm:$0xff]
    %v240 = vld [vmem:[#allocation4 + $0x50] sm:$0xff]
    %v241 = vld [vmem:[#allocation4 + $0x58] sm:$0xff]
    %v242 = vld [vmem:[#allocation4 + $0x60] sm:$0xff]
    %v243 = vld [vmem:[#allocation4 + $0x68] sm:$0x1]
    %v244 = vlaneseq
    %v245 = vshrl.u32 %v244, 7
    %v246 = vsub.s32 0, %v245
    %v247 = vrot.slane %v243, %v246
    %v249 = vsel %vm130, %v238, 0
    %251 = vmatprep.subr.mxu0 0.0
    %252 = vmatpush1.msra.mxu0 %v239
    %253 = vmatprep.subr.mxu0 0.0
    %254 = vmatpush1.msra.mxu0 %v240
    %255 = vmatprep.subr.mxu0 0.0
    %256 = vmatpush1.msra.mxu0 %v241
    %257 = vmatprep.subr.mxu0 0.0
    %258 = vmatpush1.msra.mxu0 %v242
    %259 = vmatprep.subr.mxu0 0.0
    %260 = vmatpush1.msra.mxu0 0.0
    %261 = vmatprep.subr.mxu0 0.0
    %262 = vmatpush1.msra.mxu0 0.0
    %263 = vmatprep.subr.mxu0 0.0
    %264 = vmatpush1.msra.mxu0 0.0
    %265 = vmatprep.subr.mxu0 0.0
    %266 = vmatpush1.msra.mxu0 0.0
    %267 = vmatprep.subr.mxu0 0.0
    %268 = vmatpush1.msra.mxu0 0.0
    %269 = vmatprep.subr.mxu0 0.0
    %270 = vmatpush1.msra.mxu0 0.0
    %271 = vmatprep.subr.mxu0 0.0
    %272 = vmatpush1.msra.mxu0 0.0
    %273 = vmatprep.subr.mxu0 0.0
    %274 = vmatpush1.msra.mxu0 0.0
    %275 = vmatprep.subr.mxu0 0.0
    %276 = vmatpush1.msra.mxu0 0.0
    %277 = vmatprep.subr.mxu0 0.0
    %278 = vmatpush1.msra.mxu0 0.0
    %279 = vmatprep.subr.mxu0 0.0
    %280 = vmatpush1.msra.mxu0 0.0
    %281 = vmatprep.subr.mxu0 0.0
    %282 = vmatpush1.msra.mxu0 0.0
    %283 = vmatprep.subr.mxu0 0.0
    %284 = vmatpush1.msra.mxu0 0.0
    %285 = vmatprep.subr.mxu0 0.0
    %286 = vmatpush1.msra.mxu0 0.0
    %287 = vmatprep.subr.mxu0 0.0
    %288 = vmatpush1.msra.mxu0 0.0
    %289 = vmatprep.subr.mxu0 0.0
    %290 = vmatpush1.msra.mxu0 0.0
    %291 = vmatprep.subr.mxu0 0.0
    %292 = vmatpush1.msra.mxu0 0.0
    %293 = vmatprep.subr.mxu0 0.0
    %294 = vmatpush1.msra.mxu0 0.0
    %295 = vmatprep.subr.mxu0 0.0
    %296 = vmatpush1.msra.mxu0 0.0
    %297 = vmatprep.subr.mxu0 0.0
    %298 = vmatpush1.msra.mxu0 0.0
    %299 = vmatprep.subr.mxu0 0.0
    %300 = vmatpush1.msra.mxu0 0.0
    %301 = vmatprep.subr.mxu0 0.0
    %302 = vmatpush1.msra.mxu0 0.0
    %303 = vmatprep.subr.mxu0 0.0
    %304 = vmatpush1.msra.mxu0 0.0
    %305 = vmatprep.subr.mxu0 0.0
    %306 = vmatpush1.msra.mxu0 0.0
    %307 = vmatprep.subr.mxu0 0.0
    %308 = vmatpush1.msra.mxu0 0.0
    %309 = vmatprep.subr.mxu0 0.0
    %310 = vmatpush1.msra.mxu0 0.0
    %311 = vmatprep.subr.mxu0 0.0
    %312 = vmatpush1.msra.mxu0 0.0
    %313 = vmatprep.subr.mxu0 0.0
    %314 = vmatpush1.msra.mxu0 0.0
    %315 = vmatprep.mubr.f32.mxu0 0.0
    %316 = vmatmul.mubr.f32.gmra.mrb[0].mxu0 %v249
    %v317 = vpop.f32.mrb[0].mxu0
    %v318 = vadd.f32 %v247, %v317
    %v319 = vpop.f32.mrb[0].mxu0
    %320 = vdwg.mxu0
    %vm321 = vcmp.ge.f32.partialorder %v318, 0.0
    %v322 = vmul.f32 %v318, 0.2
    %v323 = vsel %vm321, %v318, %v322
    %v324 = vld [vmem:[#allocation4 + $0x70] sm:$0xff]
    %v325 = vld [vmem:[#allocation4 + $0x78] sm:$0xff]
    %v326 = vld [vmem:[#allocation4 + $0x80] sm:$0xff]
    %v327 = vld [vmem:[#allocation4 + $0x88] sm:$0xff]
    %v328 = vld [vmem:[#allocation4 + $0x90] sm:$0x1]
    %v329 = vlaneseq
    %v330 = vshrl.u32 %v329, 7
    %v331 = vsub.s32 0, %v330
    %v332 = vrot.slane %v328, %v331
    %v334 = vsel %vm130, %v323, 0
    %336 = vmatprep.subr.mxu0 0.0
    %337 = vmatpush1.msra.mxu0 %v324
    %338 = vmatprep.subr.mxu0 0.0
    %339 = vmatpush1.msra.mxu0 %v325
    %340 = vmatprep.subr.mxu0 0.0
    %341 = vmatpush1.msra.mxu0 %v326
    %342 = vmatprep.subr.mxu0 0.0
    %343 = vmatpush1.msra.mxu0 %v327
    %344 = vmatprep.subr.mxu0 0.0
    %345 = vmatpush1.msra.mxu0 0.0
    %346 = vmatprep.subr.mxu0 0.0
    %347 = vmatpush1.msra.mxu0 0.0
    %348 = vmatprep.subr.mxu0 0.0
    %349 = vmatpush1.msra.mxu0 0.0
    %350 = vmatprep.subr.mxu0 0.0
    %351 = vmatpush1.msra.mxu0 0.0
    %352 = vmatprep.subr.mxu0 0.0
    %353 = vmatpush1.msra.mxu0 0.0
    %354 = vmatprep.subr.mxu0 0.0
    %355 = vmatpush1.msra.mxu0 0.0
    %356 = vmatprep.subr.mxu0 0.0
    %357 = vmatpush1.msra.mxu0 0.0
    %358 = vmatprep.subr.mxu0 0.0
    %359 = vmatpush1.msra.mxu0 0.0
    %360 = vmatprep.subr.mxu0 0.0
    %361 = vmatpush1.msra.mxu0 0.0
    %362 = vmatprep.subr.mxu0 0.0
    %363 = vmatpush1.msra.mxu0 0.0
    %364 = vmatprep.subr.mxu0 0.0
    %365 = vmatpush1.msra.mxu0 0.0
    %366 = vmatprep.subr.mxu0 0.0
    %367 = vmatpush1.msra.mxu0 0.0
    %368 = vmatprep.subr.mxu0 0.0
    %369 = vmatpush1.msra.mxu0 0.0
    %370 = vmatprep.subr.mxu0 0.0
    %371 = vmatpush1.msra.mxu0 0.0
    %372 = vmatprep.subr.mxu0 0.0
    %373 = vmatpush1.msra.mxu0 0.0
    %374 = vmatprep.subr.mxu0 0.0
    %375 = vmatpush1.msra.mxu0 0.0
    %376 = vmatprep.subr.mxu0 0.0
    %377 = vmatpush1.msra.mxu0 0.0
    %378 = vmatprep.subr.mxu0 0.0
    %379 = vmatpush1.msra.mxu0 0.0
    %380 = vmatprep.subr.mxu0 0.0
    %381 = vmatpush1.msra.mxu0 0.0
    %382 = vmatprep.subr.mxu0 0.0
    %383 = vmatpush1.msra.mxu0 0.0
    %384 = vmatprep.subr.mxu0 0.0
    %385 = vmatpush1.msra.mxu0 0.0
    %386 = vmatprep.subr.mxu0 0.0
    %387 = vmatpush1.msra.mxu0 0.0
    %388 = vmatprep.subr.mxu0 0.0
    %389 = vmatpush1.msra.mxu0 0.0
    %390 = vmatprep.subr.mxu0 0.0
    %391 = vmatpush1.msra.mxu0 0.0
    %392 = vmatprep.subr.mxu0 0.0
    %393 = vmatpush1.msra.mxu0 0.0
    %394 = vmatprep.subr.mxu0 0.0
    %395 = vmatpush1.msra.mxu0 0.0
    %396 = vmatprep.subr.mxu0 0.0
    %397 = vmatpush1.msra.mxu0 0.0
    %398 = vmatprep.subr.mxu0 0.0
    %399 = vmatpush1.msra.mxu0 0.0
    %400 = vmatprep.mubr.f32.mxu0 0.0
    %401 = vmatmul.mubr.f32.gmra.mrb[0].mxu0 %v334
    %v402 = vpop.f32.mrb[0].mxu0
    %v403 = vadd.f32 %v332, %v402
    %v404 = vpop.f32.mrb[0].mxu0
    %405 = vdwg.mxu0
    %406 = vst [vmem:[%s2] sm:$0xff] %v403
    // Predicated region
    $region18: #{forward.1} parent=1 // pred_check
      _
    $region19: #{forward.1} parent=1 // pred_check_branch
      %408 = sbr.rel (0) target = $region21
    $region20: #{forward.1} parent=1 // pred_region
      _
    $region21: #{forward.1} parent=1 // pred_fallthru
      _
    // Predicated region
    $region22: #{forward.1} parent=1 // pred_check
      _
    $region23: #{forward.1} parent=1 // pred_check_branch
      %410 = sbr.rel (0) target = $region25
    $region24: #{forward.1} parent=1 // pred_region
      _
    $region25: #{forward.1} parent=1 // pred_fallthru
      _
    %411 = vsyncpa [#allocation3], 1
    %412 = vsyncpa [#allocation5], 1

</llo_original>
